<compile_context>
chip_gen: v7x
topology: tpu7x:2x2x1
jax: 0.10.0
libtpu: 0.0.40
codegen_flags: <defaults>
</compile_context>

<pallas_src>
import math
import functools

import jax
import jax.numpy as jnp
from jax import lax
from jax.experimental import pallas as pl
from jax.experimental.pallas import tpu as pltpu


def _round_up(x: int, m: int) -> int:
    return ((x + m - 1) // m) * m


def _cdiv(a: int, b: int) -> int:
    return (a + b - 1) // b


def _make_linear_kernel(k_rem: int, use_scratch: bool):
    """Build the tiled-linear kernel body.

    Refs: x (tm, tk), w (tn, tk), b (1, tn), o (tm, tn)[, acc (tm, tn) f32].
    Grid: (M-blocks, N-blocks, K-blocks); K is the last ("arbitrary") axis so
    the accumulator block is resident across the whole K reduction.

    k_rem != 0 means the last K block is partial (ragged K, no wrapper pad):
    the tail columns of BOTH operands hold undefined VMEM bytes and must be
    zeroed before feeding the MXU (0*0 == 0 even if the garbage is NaN/Inf).
    Ragged M / N tails need no masking: garbage rows only affect output
    rows/cols that Pallas never writes back to HBM.
    """

    def kernel(x_ref, w_ref, b_ref, o_ref, *scratch):
        acc_ref = scratch[0] if use_scratch else o_ref
        k = pl.program_id(2)
        nk = pl.num_programs(2)

        @pl.when(k == 0)
        def _():
            acc_ref[...] = jnp.broadcast_to(
                b_ref[...].astype(jnp.float32), acc_ref.shape
            )

        x = x_ref[...]
        w = w_ref[...]
        if k_rem:
            tk = x.shape[-1]
            limit = jnp.where(k == nk - 1, k_rem, tk)
            col = lax.broadcasted_iota(jnp.int32, (1, tk), 1)
            valid = col < limit
            x = jnp.where(valid, x, 0)
            w = jnp.where(valid, w, 0)

        # Contract the lane (last) dims of both operands: (tm,tk) x (tn,tk)
        # -> (tm,tn).  Keeps the weight in its PyTorch (N, K) layout so the
        # wrapper never re-streams it through HBM.
        acc_ref[...] += lax.dot_general(
            x, w,
            dimension_numbers=(((1,), (1,)), ((), ())),
            preferred_element_type=jnp.float32,
        )

        if use_scratch:
            @pl.when(k == nk - 1)
            def _():
                o_ref[...] = acc_ref[...].astype(o_ref.dtype)

    return kernel


@functools.partial(jax.jit, static_argnames=("tm", "tn", "tk", "compute_dtype"))
def pseudo_inverse_linear_fwd(
    x, weight, bias=None, *, tm=512, tn=512, tk=1024, compute_dtype=None
):
    """y = x @ weight.T + bias via a tiled Pallas TPU matmul kernel.

    x:      (M, K)
    weight: (N, K)  (out_features, in_features)
    bias:   (N,) or None
    compute_dtype: optional operand dtype for the matmul (e.g. jnp.bfloat16);
                   accumulation stays f32, output keeps x.dtype.
    """
    M, K = x.shape
    N, K2 = weight.shape
    assert K == K2, "in_features mismatch"
    out_dtype = x.dtype

    if bias is None:
        bias = jnp.zeros((N,), dtype=jnp.float32)

    x_in = x if compute_dtype is None else x.astype(compute_dtype)
    w_in = weight if compute_dtype is None else weight.astype(compute_dtype)
    b_in = bias.reshape(1, N)

    op_dtype = jnp.dtype(x_in.dtype)
    in_itemsize = op_dtype.itemsize
    out_itemsize = jnp.dtype(out_dtype).itemsize

    # Sublane packing: 8 rows for 4-byte dtypes, 16 for bf16, 32 for int8/fp8.
    sublane = max(8, 32 // max(1, in_itemsize))

    # Clamp tiles to the array dims while keeping (sublane, 128) alignment.
    tm = _round_up(min(tm, _round_up(M, sublane)), sublane)
    tn = _round_up(min(tn, _round_up(N, 128)), 128)
    tk = _round_up(min(tk, _round_up(K, 128)), 128)

    # v7x shards the "parallel" grid axes across 2 TensorCores; avoid a
    # degenerate single parallel block when the problem can be split.
    if _cdiv(M, tm) * _cdiv(N, tn) == 1:
        if tn > 128 and N > 128:
            tn = _round_up(_cdiv(tn, 2), 128)
        elif tm > sublane and M > sublane:
            tm = _round_up(_cdiv(tm, 2), sublane)

    gm, gn, gk = _cdiv(M, tm), _cdiv(N, tn), _cdiv(K, tk)
    k_rem = K % tk
    use_scratch = out_dtype != jnp.float32

    kernel = _make_linear_kernel(k_rem, use_scratch)
    scratch_shapes = [pltpu.VMEM((tm, tn), jnp.float32)] if use_scratch else []

    w_spec = pl.BlockSpec((tn, tk), lambda i, j, k: (j, k))
    if gm == 1 and gk >= 2 and hasattr(pl, "Buffered"):
        # Skinny-M, weight-streaming shapes: deepen the weight pipeline so the
        # (tn, tk) HBM->VMEM DMA hides behind the short MXU step.
        try:
            w_spec = pl.BlockSpec(
                (tn, tk), lambda i, j, k: (j, k), pipeline_mode=pl.Buffered(3)
            )
        except TypeError:
            pass  # older BlockSpec without pipeline_mode; default 2-deep

    # Resident VMEM: double-buffered x / out, up to 3-deep weight, bias, acc.
    resident = (
        2 * tm * tk * in_itemsize
        + 3 * tn * tk * in_itemsize
        + 2 * tm * tn * out_itemsize
        + 2 * tn * 4
        + (tm * tn * 4 if use_scratch else 0)
    )
    vmem_cap = 64 * 1024 * 1024  # v7x per-TC VMEM (smallest current generation)
    try:
        info = pltpu.get_tpu_info()
        vmem_cap = int(getattr(info, "vmem_capacity_bytes", vmem_cap)) or vmem_cap
    except Exception:
        pass
    vmem_limit = min(
        max(2 * resident, 32 * 1024 * 1024),
        max(vmem_cap - 16 * 1024 * 1024, 32 * 1024 * 1024),
    )

    cost = pl.CostEstimate(
        flops=2 * M * N * K,
        transcendentals=0,
        # Blocked schedule re-reads weight gm times and x gn times.
        bytes_accessed=(
            in_itemsize * (gn * M * K + gm * N * K)
            + out_itemsize * M * N
            + 4 * N * gm
        ),
    )

    return pl.pallas_call(
        kernel,
        out_shape=jax.ShapeDtypeStruct((M, N), out_dtype),
        grid_spec=pltpu.PrefetchScalarGridSpec(
            num_scalar_prefetch=0,
            grid=(gm, gn, gk),
            in_specs=[
                pl.BlockSpec((tm, tk), lambda i, j, k: (i, k)),  # x tile
                w_spec,                                          # weight (N,K) tile
                pl.BlockSpec((1, tn), lambda i, j, k: (0, j)),   # bias tile
            ],
            out_specs=pl.BlockSpec((tm, tn), lambda i, j, k: (i, j)),
            scratch_shapes=scratch_shapes,
        ),
        compiler_params=pltpu.CompilerParams(
            dimension_semantics=("parallel", "parallel", "arbitrary"),
            vmem_limit_bytes=int(vmem_limit),
        ),
        cost_estimate=cost,
    )(x_in, w_in, b_in)


def init_params(key, in_features, out_features):
    """Deterministic init matching the PyTorch module's reset_parameters().

    kaiming_uniform_(a=sqrt(5)) on a (out, in) weight reduces to
    U(-1/sqrt(fan_in), 1/sqrt(fan_in)); bias uses the same bound.
    """
    k_w, k_b = jax.random.split(key)
    bound = 1.0 / math.sqrt(in_features) if in_features > 0 else 0.0
    weight = jax.random.uniform(
        k_w, (out_features, in_features), jnp.float32, minval=-bound, maxval=bound
    )
    bias = jax.random.uniform(
        k_b, (out_features,), jnp.float32, minval=-bound, maxval=bound
    )
    return weight, bias


if __name__ == "__main__":
    key = jax.random.PRNGKey(0)

    # --- small demo shape consistent with the module: batch=8, in=32, out=16 ---
    batch, in_features, out_features = 8, 32, 16
    k_x, k_p, k_rest = jax.random.split(key, 3)
    x = jax.random.normal(k_x, (batch, in_features), dtype=jnp.float32)
    weight, bias = init_params(k_p, in_features, out_features)

    y = jax.block_until_ready(pseudo_inverse_linear_fwd(x, weight, bias))
    y_ref = x @ weight.T + bias
    assert y.shape == (batch, out_features)
    assert jnp.allclose(y, y_ref, atol=2e-2, rtol=2e-2), "demo-1 mismatch"

    # --- ragged shapes: partial M/N blocks + masked partial K tile + K loop ---
    M2, K2, N2 = 40, 300, 200
    k_x2, k_p2, k_rest = jax.random.split(k_rest, 3)
    x2 = jax.random.normal(k_x2, (M2, K2), dtype=jnp.float32)
    w2, b2 = init_params(k_p2, K2, N2)
    y2 = jax.block_until_ready(
        pseudo_inverse_linear_fwd(x2, w2, b2, tm=16, tn=128, tk=128)
    )
    y2_ref = x2 @ w2.T + b2
    assert y2.shape == (M2, N2)
    assert jnp.allclose(y2, y2_ref, atol=2e-2, rtol=2e-2), "demo-2 mismatch"

    # --- skinny-M + multi-K: exercises the Buffered(3) weight pipeline and
    #     the single-parallel-block split heuristic (K divides tk; no masking) ---
    M3, K3, N3 = 8, 512, 256
    k_x3, k_p3, _ = jax.random.split(k_rest, 3)
    x3 = jax.random.normal(k_x3, (M3, K3), dtype=jnp.float32)
    w3, b3 = init_params(k_p3, K3, N3)
    y3 = jax.block_until_ready(pseudo_inverse_linear_fwd(x3, w3, b3, tk=256))
    y3_ref = x3 @ w3.T + b3
    assert y3.shape == (M3, N3)
    assert jnp.allclose(y3, y3_ref, atol=2e-2, rtol=2e-2), "demo-3 mismatch"

    # --- bf16 operand path (f32 accumulation, f32 output) ---
    y4 = jax.block_until_ready(
        pseudo_inverse_linear_fwd(x2, w2, b2, compute_dtype=jnp.bfloat16)
    )
    assert jnp.allclose(y4, y2_ref, atol=5e-2, rtol=5e-2), "demo-4 mismatch"

    print("KERNEL_OK")
</pallas_src>

<mosaic_0001>
module attributes {stable_mosaic.version = 11 : i64} {
  func.func @kernel(%arg0: i32, %arg1: i32, %arg2: i32, %arg3: memref<8x128xf32, #tpu.memory_space<vmem>>, %arg4: memref<128x128xf32, #tpu.memory_space<vmem>>, %arg5: memref<1x128xf32, #tpu.memory_space<vmem>>, %arg6: memref<8x128xf32, #tpu.memory_space<vmem>>) attributes {dimension_semantics = [#tpu.dimension_semantics<parallel>, #tpu.dimension_semantics<parallel>, #tpu.dimension_semantics<arbitrary>], iteration_bounds = array<i64: 1, 1, 1>, scalar_prefetch = 0 : i64, scratch_operands = 0 : i64, tpu.core_type = #tpu.core_type<tc>, window_params = [{transform_indices = @transform_0, window_bounds = array<i64: 8, 128>}, {transform_indices = @transform_1, window_bounds = array<i64: 128, 128>}, {transform_indices = @transform_2, window_bounds = array<i64: 1, 128>}, {transform_indices = @transform_3, window_bounds = array<i64: 8, 128>}]} {
    %c0_i32 = arith.constant 0 : i32
    %0 = arith.cmpi eq, %arg2, %c0_i32 : i32
    %1 = arith.extui %0 : i1 to i32
    %c0_i32_0 = arith.constant 0 : i32
    %2 = arith.cmpi ne, %1, %c0_i32_0 : i32
    scf.if %2 {
      %c0_11 = arith.constant 0 : index
      %c0_12 = arith.constant 0 : index
      %24 = vector.load %arg5[%c0_11, %c0_12] : memref<1x128xf32, #tpu.memory_space<vmem>>, vector<1x128xf32>
      %25 = vector.shape_cast %24 : vector<1x128xf32> to vector<1x128xf32>
      %26 = vector.broadcast %25 : vector<1x128xf32> to vector<8x128xf32>
      %c0_13 = arith.constant 0 : index
      %c0_14 = arith.constant 0 : index
      %27 = vector.load %arg6[%c0_13, %c0_14] : memref<8x128xf32, #tpu.memory_space<vmem>>, vector<8x128xf32>
      tpu.vector_store %arg6[%c0_13, %c0_14], %26 {strides = array<i32>} : memref<8x128xf32, #tpu.memory_space<vmem>>, vector<8x128xf32>,
    } else {
    }
    %c0 = arith.constant 0 : index
    %c0_1 = arith.constant 0 : index
    %3 = vector.load %arg3[%c0, %c0_1] : memref<8x128xf32, #tpu.memory_space<vmem>>, vector<8x128xf32>
    %c0_2 = arith.constant 0 : index
    %c0_3 = arith.constant 0 : index
    %4 = vector.load %arg4[%c0_2, %c0_3] : memref<128x128xf32, #tpu.memory_space<vmem>>, vector<128x128xf32>
    %c0_i32_4 = arith.constant 0 : i32
    %5 = arith.cmpi eq, %arg2, %c0_i32_4 : i32
    %c32_i32 = arith.constant 32 : i32
    %c128_i32 = arith.constant 128 : i32
    %6 = arith.select %5, %c32_i32, %c128_i32 : i32
    %7 = tpu.iota {dimensions = array<i32: 1>} : vector<1x128xi32>
    %8 = vector.broadcast %6 : i32 to vector<1x128xi32>
    %9 = arith.cmpi slt, %7, %8 : vector<1x128xi32>
    %c0_i32_5 = arith.constant 0 : i32
    %10 = arith.sitofp %c0_i32_5 : i32 to f32
    %11 = vector.shape_cast %9 : vector<1x128xi1> to vector<1x128xi1>
    %12 = vector.broadcast %11 : vector<1x128xi1> to vector<8x128xi1>
    %13 = vector.broadcast %10 : f32 to vector<8x128xf32>
    %14 = arith.select %12, %3, %13 : vector<8x128xi1>, vector<8x128xf32>
    %c0_i32_6 = arith.constant 0 : i32
    %15 = arith.sitofp %c0_i32_6 : i32 to f32
    %16 = vector.shape_cast %9 : vector<1x128xi1> to vector<1x128xi1>
    %17 = vector.broadcast %16 : vector<1x128xi1> to vector<128x128xi1>
    %18 = vector.broadcast %15 : f32 to vector<128x128xf32>
    %19 = arith.select %17, %4, %18 : vector<128x128xi1>, vector<128x128xf32>
    %c0_7 = arith.constant 0 : index
    %c0_8 = arith.constant 0 : index
    %20 = vector.load %arg6[%c0_7, %c0_8] : memref<8x128xf32, #tpu.memory_space<vmem>>, vector<8x128xf32>
    %cst = arith.constant dense<0.000000e+00> : vector<8x128xf32>
    %21 = tpu.matmul %14, %19, %cst {dimension_numbers = #tpu.dot_dimension_numbers<[1], [1], [0], [0], [0, 0, 1, 0], [], []>} : vector<8x128xf32>, vector<128x128xf32>, vector<8x128xf32> -> vector<8x128xf32>
    %22 = arith.addf %20, %21 : vector<8x128xf32>
    %c0_9 = arith.constant 0 : index
    %c0_10 = arith.constant 0 : index
    %23 = vector.load %arg6[%c0_9, %c0_10] : memref<8x128xf32, #tpu.memory_space<vmem>>, vector<8x128xf32>
    tpu.vector_store %arg6[%c0_9, %c0_10], %22 {strides = array<i32>} : memref<8x128xf32, #tpu.memory_space<vmem>>, vector<8x128xf32>,
    return
  }
  func.func @transform_0(%arg0: i32, %arg1: i32, %arg2: i32) -> (i32, i32) {
    %c0_i32 = arith.constant 0 : i32
    return %arg0, %arg2 : i32, i32
  }
  func.func @transform_1(%arg0: i32, %arg1: i32, %arg2: i32) -> (i32, i32) {
    %c0_i32 = arith.constant 0 : i32
    return %arg1, %arg2 : i32, i32
  }
  func.func @transform_2(%arg0: i32, %arg1: i32, %arg2: i32) -> (i32, i32) {
    %c0_i32 = arith.constant 0 : i32
    %c0_i32_0 = arith.constant 0 : i32
    return %c0_i32, %arg1 : i32, i32
  }
  func.func @transform_3(%arg0: i32, %arg1: i32, %arg2: i32) -> (i32, i32) {
    %c0_i32 = arith.constant 0 : i32
    return %arg0, %arg1 : i32, i32
  }
}

</mosaic_0001>

<llo_original>
// kernel: pseudo_inverse_linear_fwd.1
$region0: #{pseudo_inverse_linear_fwd.1}
  #allocation0 [shape = 'u32[]', space=smem, size = 0x4, offset = 0x4, fixed_abs, tag = 'smem constant byte address 0x4 - core index']
  #allocation1 [shape = 'u32[144,128]{1,0:T(1,128)}', space=vmem, size = 0x12000, scoped, tag = 'internal scratch']
  %s0 = inlined_call_operand.hbm [shape: f32[8,32], index: 0, kind: input, shape index: {}]
  %s1 = inlined_call_operand.hbm [shape: f32[16,32], index: 1, kind: input, shape index: {}]
  %s2 = inlined_call_operand.vmem [shape: f32[1,16], index: 2, kind: input, shape index: {}]
  %s3 = inlined_call_operand.hbm [shape: f32[8,16], index: 3, kind: output, shape index: {}]
  %s4 = sld [smem:[#allocation0]]
  $region34: #{pseudo_inverse_linear_fwd.1} parent=0
    _
  %s6 = ssub.s32 1, %s4
  %s7 = scalar_select 0, %s6, %s4
  $region1: #{pseudo_inverse_linear_fwd.1} parent=0
    #allocation2 [shape = 'u8[4096]{0}', space=vmem, size = 0x1000, scoped, tag = 'input window, operand 0, single buffered']
    #allocation3 [shape = 's32[1]{0}', space=sflag, size = 0x4, scoped, tag = 'scoped memory for pseudo_inverse_linear_fwd.1']
    #allocation4 [shape = 's32[1]{0}', space=sflag, size = 0x4, scoped, tag = 'scoped memory for pseudo_inverse_linear_fwd.1']
    #allocation5 [shape = 'u8[65536]{0}', space=vmem, size = 0x10000, scoped, tag = 'input window, operand 1, single buffered']
    #allocation6 [shape = 's32[1]{0}', space=sflag, size = 0x4, scoped, tag = 'scoped memory for pseudo_inverse_linear_fwd.1']
    #allocation7 [shape = 'u8[4096]{0}', space=vmem, size = 0x1000, scoped, tag = 'output window, operand 0, single buffered']
    %8 = vsyncpa [#allocation3], 0
    %9 = vsyncpa [#allocation6], 0
    %10 = vsyncpa [#allocation4], 0
    // Predicated region
    $region2: #{pseudo_inverse_linear_fwd.1} parent=1 // pred_check
      _
    $region3: #{pseudo_inverse_linear_fwd.1} parent=1 // pred_check_branch
      %12 = sbr.rel (0) target = $region5
    $region4: #{pseudo_inverse_linear_fwd.1} parent=1 // pred_region
      %s14 = ssub.s32 128, 128
      %15 = vsyncadd [#allocation3], %s14
      %s17 = sshll.u32 [#allocation2], 4
      %s18 = int_to_ptr.vmem [resolvable:$true] %s17
      %20 = dma.hbm_to_vmem [thread:$0]  %s0, 128, %s18, [#allocation3]
    $region5: #{pseudo_inverse_linear_fwd.1} parent=1 // pred_fallthru
      _
    // Predicated region
    $region6: #{pseudo_inverse_linear_fwd.1} parent=1 // pred_check
      _
    $region7: #{pseudo_inverse_linear_fwd.1} parent=1 // pred_check_branch
      %22 = sbr.rel (0) target = $region9
    $region8: #{pseudo_inverse_linear_fwd.1} parent=1 // pred_region
      %s24 = ssub.s32 2048, 256
      %25 = vsyncadd [#allocation6], %s24
      %s26 = sshll.u32 [#allocation5], 4
      %s27 = int_to_ptr.vmem [resolvable:$true] %s26
      %32 = dma.hbm_to_vmem [thread:$0]  %s1, 256, %s27, [#allocation6], 128, 128, 8
    $region9: #{pseudo_inverse_linear_fwd.1} parent=1 // pred_fallthru
      _
    // Predicated region
    $region10: #{pseudo_inverse_linear_fwd.1} parent=1 // pred_check
      _
    $region11: #{pseudo_inverse_linear_fwd.1} parent=1 // pred_check_branch
      %34 = sbr.rel (0) target = $region13
    $region12: #{pseudo_inverse_linear_fwd.1} parent=1 // pred_region
      _
    $region13: #{pseudo_inverse_linear_fwd.1} parent=1 // pred_fallthru
      _
    // Predicated region
    $region14: #{pseudo_inverse_linear_fwd.1} parent=1 // pred_check
      _
    $region15: #{pseudo_inverse_linear_fwd.1} parent=1 // pred_check_branch
      %36 = sbr.rel (0) target = $region17
    $region16: #{pseudo_inverse_linear_fwd.1} parent=1 // pred_region
      %37 = dma.done [#allocation3], 128
    $region17: #{pseudo_inverse_linear_fwd.1} parent=1 // pred_fallthru
      _
    // Predicated region
    $region18: #{pseudo_inverse_linear_fwd.1} parent=1 // pred_check
      _
    $region19: #{pseudo_inverse_linear_fwd.1} parent=1 // pred_check_branch
      %39 = sbr.rel (0) target = $region21
    $region20: #{pseudo_inverse_linear_fwd.1} parent=1 // pred_region
      %40 = dma.done [#allocation6], 2048
    $region21: #{pseudo_inverse_linear_fwd.1} parent=1 // pred_fallthru
      _
    %p41 = scmp.eq.s32.totalorder 0, 0
    // Predicated region
    $region22: #{pseudo_inverse_linear_fwd.1} parent=1 // pred_check
      %p42 = pneg %p41
    $region23: #{pseudo_inverse_linear_fwd.1} parent=1 // pred_check_branch
      %44 = sbr.rel (%p42) target = $region25
    $region24: #{pseudo_inverse_linear_fwd.1} parent=1 // pred_region
      %v45 = vld [vmem:[%s2] sm:$0x1]
      %v47 = vlaneseq
      %v48 = vshrl.u32 %v47, 7
      %v49 = vsub.s32 0, %v48
      %v50 = vrot.slane %v45, %v49
      %52 = vst [vmem:[#allocation7] sm:$0xff] %v50
    $region25: #{pseudo_inverse_linear_fwd.1} parent=1 // pred_fallthru
      _
    %v53 = vld [vmem:[#allocation2] sm:$0xff]
    %v54 = vld [vmem:[#allocation5] sm:$0xff]
    %v55 = vld [vmem:[#allocation5 + $0x8] sm:$0xff]
    %v56 = vld [vmem:[#allocation5 + $0x10] sm:$0xff]
    %v57 = vld [vmem:[#allocation5 + $0x18] sm:$0xff]
    %v58 = vld [vmem:[#allocation5 + $0x20] sm:$0xff]
    %v59 = vld [vmem:[#allocation5 + $0x28] sm:$0xff]
    %v60 = vld [vmem:[#allocation5 + $0x30] sm:$0xff]
    %v61 = vld [vmem:[#allocation5 + $0x38] sm:$0xff]
    %v62 = vld [vmem:[#allocation5 + $0x40] sm:$0xff]
    %v63 = vld [vmem:[#allocation5 + $0x48] sm:$0xff]
    %v64 = vld [vmem:[#allocation5 + $0x50] sm:$0xff]
    %v65 = vld [vmem:[#allocation5 + $0x58] sm:$0xff]
    %v66 = vld [vmem:[#allocation5 + $0x60] sm:$0xff]
    %v67 = vld [vmem:[#allocation5 + $0x68] sm:$0xff]
    %v68 = vld [vmem:[#allocation5 + $0x70] sm:$0xff]
    %v69 = vld [vmem:[#allocation5 + $0x78] sm:$0xff]
    %s70 = scalar_select %p41, 32, 128
    %v71 = vlaneseq
    %v72 = vand.u32 %v71, 127
    %v73 = vstv %s70
    %vm74 = vcmp.lt.s32.totalorder %v72, %v73
    %v75 = vsel %vm74, 1, 0
    %vm76 = vcmp.eq.s32.totalorder %v75, 1
    %v77 = vsel %vm76, %v53, 0.0
    %v78 = vsel %vm76, %v54, 0.0
    %v79 = vsel %vm76, %v55, 0.0
    %v80 = vsel %vm76, %v56, 0.0
    %v81 = vsel %vm76, %v57, 0.0
    %v82 = vsel %vm76, %v58, 0.0
    %v83 = vsel %vm76, %v59, 0.0
    %v84 = vsel %vm76, %v60, 0.0
    %v85 = vsel %vm76, %v61, 0.0
    %v86 = vsel %vm76, %v62, 0.0
    %v87 = vsel %vm76, %v63, 0.0
    %v88 = vsel %vm76, %v64, 0.0
    %v89 = vsel %vm76, %v65, 0.0
    %v90 = vsel %vm76, %v66, 0.0
    %v91 = vsel %vm76, %v67, 0.0
    %v92 = vsel %vm76, %v68, 0.0
    %v93 = vsel %vm76, %v69, 0.0
    %v94 = vld [vmem:[#allocation7] sm:$0xff]
    %95 = vmatprep.subr.mxu0 0.0
    %96 = vmatpush1.xpose.msra.mxu0 %v78
    %97 = vmatprep.subr.mxu0 0.0
    %98 = vmatpush1.xpose.msra.mxu0 %v79
    %99 = vmatprep.subr.mxu0 0.0
    %100 = vmatpush1.xpose.msra.mxu0 %v80
    %101 = vmatprep.subr.mxu0 0.0
    %102 = vmatpush1.xpose.msra.mxu0 %v81
    %103 = vmatprep.subr.mxu0 0.0
    %104 = vmatpush1.xpose.msra.mxu0 %v82
    %105 = vmatprep.subr.mxu0 0.0
    %106 = vmatpush1.xpose.msra.mxu0 %v83
    %107 = vmatprep.subr.mxu0 0.0
    %108 = vmatpush1.xpose.msra.mxu0 %v84
    %109 = vmatprep.subr.mxu0 0.0
    %110 = vmatpush1.xpose.msra.mxu0 %v85
    %111 = vmatprep.subr.mxu0 0.0
    %112 = vmatpush1.xpose.msra.mxu0 %v86
    %113 = vmatprep.subr.mxu0 0.0
    %114 = vmatpush1.xpose.msra.mxu0 %v87
    %115 = vmatprep.subr.mxu0 0.0
    %116 = vmatpush1.xpose.msra.mxu0 %v88
    %117 = vmatprep.subr.mxu0 0.0
    %118 = vmatpush1.xpose.msra.mxu0 %v89
    %119 = vmatprep.subr.mxu0 0.0
    %120 = vmatpush1.xpose.msra.mxu0 %v90
    %121 = vmatprep.subr.mxu0 0.0
    %122 = vmatpush1.xpose.msra.mxu0 %v91
    %123 = vmatprep.subr.mxu0 0.0
    %124 = vmatpush1.xpose.msra.mxu0 %v92
    %125 = vmatprep.subr.mxu0 0.0
    %126 = vmatpush1.xpose.msra.mxu0 %v93
    %127 = vmatprep.subr.mxu0 0.0
    %128 = vmatpush1.xpose.msra.mxu0 0.0
    %129 = vmatprep.subr.mxu0 0.0
    %130 = vmatpush1.xpose.msra.mxu0 0.0
    %131 = vmatprep.subr.mxu0 0.0
    %132 = vmatpush1.xpose.msra.mxu0 0.0
    %133 = vmatprep.subr.mxu0 0.0
    %134 = vmatpush1.xpose.msra.mxu0 0.0
    %135 = vmatprep.subr.mxu0 0.0
    %136 = vmatpush1.xpose.msra.mxu0 0.0
    %137 = vmatprep.subr.mxu0 0.0
    %138 = vmatpush1.xpose.msra.mxu0 0.0
    %139 = vmatprep.subr.mxu0 0.0
    %140 = vmatpush1.xpose.msra.mxu0 0.0
    %141 = vmatprep.subr.mxu0 0.0
    %142 = vmatpush1.xpose.msra.mxu0 0.0
    %143 = vmatprep.subr.mxu0 0.0
    %144 = vmatpush1.xpose.msra.mxu0 0.0
    %145 = vmatprep.subr.mxu0 0.0
    %146 = vmatpush1.xpose.msra.mxu0 0.0
    %147 = vmatprep.subr.mxu0 0.0
    %148 = vmatpush1.xpose.msra.mxu0 0.0
    %149 = vmatprep.subr.mxu0 0.0
    %150 = vmatpush1.xpose.msra.mxu0 0.0
    %151 = vmatprep.subr.mxu0 0.0
    %152 = vmatpush1.xpose.msra.mxu0 0.0
    %153 = vmatprep.subr.mxu0 0.0
    %154 = vmatpush1.xpose.msra.mxu0 0.0
    %155 = vmatprep.subr.mxu0 0.0
    %156 = vmatpush1.xpose.msra.mxu0 0.0
    %157 = vmatprep.subr.mxu0 0.0
    %158 = vmatpush1.xpose.msra.mxu0 0.0
    %159 = vmatprep.mubr.f32.mxu0 0.0
    %160 = vmatmul.mubr.f32.gmra.mrb[0].mxu0 %v77
    %v161 = vpop.f32.mrb[0].mxu0
    %v162 = vadd.f32 0.0, %v161
    %v163 = vpop.f32.mrb[0].mxu0
    %164 = vdwg.mxu0
    %v165 = vadd.f32 %v94, %v162
    %166 = vst [vmem:[#allocation7] sm:$0xff] %v165
    // Predicated region
    $region26: #{pseudo_inverse_linear_fwd.1} parent=1 // pred_check
      _
    $region27: #{pseudo_inverse_linear_fwd.1} parent=1 // pred_check_branch
      %168 = sbr.rel (0) target = $region29
    $region28: #{pseudo_inverse_linear_fwd.1} parent=1 // pred_region
      %s170 = ssub.s32 128, 128
      %171 = vsyncadd [#allocation4], %s170
      %s173 = sshll.u32 [#allocation7], 4
      %s174 = int_to_ptr.vmem [resolvable:$true] %s173
      %176 = dma.vmem_to_hbm [thread:$0]  %s174, 128, %s3, [#allocation4]
    $region29: #{pseudo_inverse_linear_fwd.1} parent=1 // pred_fallthru
      _
    // Predicated region
    $region30: #{pseudo_inverse_linear_fwd.1} parent=1 // pred_check
      _
    $region31: #{pseudo_inverse_linear_fwd.1} parent=1 // pred_check_branch
      %178 = sbr.rel (0) target = $region33
    $region32: #{pseudo_inverse_linear_fwd.1} parent=1 // pred_region
      %179 = dma.done [#allocation4], 128
    $region33: #{pseudo_inverse_linear_fwd.1} parent=1 // pred_fallthru
      _
    %180 = vsyncpa [#allocation3], 1
    %181 = vsyncpa [#allocation6], 1
    %182 = vsyncpa [#allocation4], 1

</llo_original>
